<compile_context>
chip_gen: v7x
topology: tpu7x:2x2x1
jax: 0.10.0
libtpu: 0.0.40
codegen_flags: <defaults>
</compile_context>

<pallas_src>
import jax
import jax.numpy as jnp
from jax.experimental import pallas as pl
from jax.experimental.pallas import tpu as pltpu


def _round_up(v, m):
    return (v + m - 1) // m * m


def _make_kernel(L):
    """Per-row-block kernel: rows = flattened (batch, channel), lanes = time."""

    def kernel(x_ref, wb_ref, trend_ref, seas_ref):
        # x_ref  : (R, L)  input rows, time on the lane axis
        # wb_ref : (R, 4)  per-row taps + bias: [w_{t-1}, w_t, w_{t+1}, b]
        x = x_ref[...].astype(jnp.float32)
        wb = wb_ref[...].astype(jnp.float32)

        if L > 1:
            lane = jax.lax.broadcasted_iota(jnp.int32, (1, L), 1)
            # x[t-1]: rotate right along lanes, zero the global t == 0 column.
            x_prev = jnp.where(lane == 0, 0.0, pltpu.roll(x, shift=1, axis=1))
            # x[t+1]: rotate left along lanes, zero the global t == L-1 column.
            x_next = jnp.where(lane == L - 1, 0.0,
                               pltpu.roll(x, shift=L - 1, axis=1))
        else:  # degenerate length-1 sequence: both neighbours are zero padding
            x_prev = jnp.zeros_like(x)
            x_next = jnp.zeros_like(x)

        # PyTorch Conv1d is cross-correlation: w[:,0]->t-1, w[:,1]->t, w[:,2]->t+1.
        trend = (wb[:, 0:1] * x_prev + wb[:, 1:2] * x + wb[:, 2:3] * x_next
                 + wb[:, 3:4])

        trend_ref[...] = trend.astype(trend_ref.dtype)
        seas_ref[...] = (x - trend).astype(seas_ref.dtype)

    return kernel


def robust_decomposition(x, trend_w, trend_b, *, block_rows=None):
    """x: (B, L, C); trend_w: (C, 3) depthwise taps; trend_b: (C,) bias.

    Returns (trend, seasonal), both (B, L, C) in x.dtype.
    """
    B, L, C = x.shape
    rows = B * C

    # ---- re-layout to lane-dense rows: (B, L, C) -> (B*C, L), time on lanes ----
    x_rows = jnp.transpose(x, (0, 2, 1)).reshape(rows, L)
    wb = jnp.concatenate(
        [trend_w.astype(jnp.float32).reshape(C, 3),
         trend_b.astype(jnp.float32).reshape(C, 1)], axis=1)        # (C, 4)
    wb_rows = jnp.tile(wb, (B, 1))                                   # (rows, 4)

    # ---- row-block size: multiple of 8, ~<=2 MiB f32 per block, and enough grid
    #      steps for pipelining / megacore when the problem is large enough.
    lane_pad = _round_up(L, 128)          # lanes actually occupied in VMEM
    r_vmem = max(8, ((2 * 1024 * 1024) // (4 * lane_pad)) // 8 * 8)
    r_steps = max(8, _round_up(pl.cdiv(rows, 8), 8))     # aim for ~>= 8 steps
    r_floor = max(8, ((256 * 1024) // (4 * lane_pad)) // 8 * 8)  # avoid tiny blocks
    r_cap = min(r_vmem, max(r_steps, r_floor))
    if block_rows is not None:
        r_cap = max(8, (block_rows // 8) * 8)
    R = rows if rows <= r_cap else r_cap   # R is a multiple of 8 or == full rows
    n_blocks = pl.cdiv(rows, R)
    # TODO(synk): for pathologically long L (block at 8 rows still > VMEM budget)
    # an additional L tiling with lane halos would be needed; typical Robformer
    # sequence lengths (<= a few thousand) are covered by the full-L block.

    out_shape = (jax.ShapeDtypeStruct((rows, L), x.dtype),
                 jax.ShapeDtypeStruct((rows, L), x.dtype))

    grid_spec = pltpu.PrefetchScalarGridSpec(
        num_scalar_prefetch=0,
        grid=(n_blocks,),
        in_specs=[
            pl.BlockSpec((R, L), lambda i: (i, 0)),    # x rows (lane-dense)
            pl.BlockSpec((R, 4), lambda i: (i, 0)),    # fused taps + bias
        ],
        out_specs=[
            pl.BlockSpec((R, L), lambda i: (i, 0)),
            pl.BlockSpec((R, L), lambda i: (i, 0)),
        ],
    )

    itemsize = x.dtype.itemsize
    trend_rows, seas_rows = pl.pallas_call(
        _make_kernel(L),
        out_shape=out_shape,
        grid_spec=grid_spec,
        compiler_params=pltpu.CompilerParams(
            dimension_semantics=("parallel",),
            vmem_limit_bytes=48 * 1024 * 1024),
        cost_estimate=pl.CostEstimate(
            flops=7 * rows * L,
            transcendentals=0,
            bytes_accessed=3 * rows * L * itemsize),
    )(x_rows, wb_rows)

    trend = trend_rows.reshape(B, C, L).transpose(0, 2, 1)
    seasonal = seas_rows.reshape(B, C, L).transpose(0, 2, 1)
    return trend, seasonal


def _reference(x, trend_w, trend_b):
    # pure-JAX reference of the depthwise conv1d (k=3, pad=1, groups=C)
    B, L, C = x.shape
    xp = jnp.pad(x, ((0, 0), (1, 1), (0, 0)))
    trend = (xp[:, 0:L, :] * trend_w[:, 0][None, None, :] +
             xp[:, 1:L + 1, :] * trend_w[:, 1][None, None, :] +
             xp[:, 2:L + 2, :] * trend_w[:, 2][None, None, :] +
             trend_b[None, None, :])
    return trend, x - trend


if __name__ == "__main__":
    key = jax.random.PRNGKey(0)
    kx, kw, kb, kx2, kw2, kb2, kx3 = jax.random.split(key, 7)
    bound = 1.0 / jnp.sqrt(3.0)   # nn.Conv1d default init bound (fan_in * k = 3)

    # --- case 1: small shapes consistent with the module (B=2, L=8, C=4) ---
    B, L, C = 2, 8, 4
    x = jax.random.normal(kx, (B, L, C), dtype=jnp.float32)
    trend_w = jax.random.uniform(kw, (C, 3), minval=-bound, maxval=bound,
                                 dtype=jnp.float32)   # depthwise weight (C,1,3) squeezed
    trend_b = jax.random.uniform(kb, (C,), minval=-bound, maxval=bound,
                                 dtype=jnp.float32)
    # NOTE: seasonal_conv parameters exist in __init__ but are unused in forward().

    trend, seasonal = robust_decomposition(x, trend_w, trend_b)
    jax.block_until_ready((trend, seasonal))
    trend_ref, seasonal_ref = _reference(x, trend_w, trend_b)
    assert jnp.allclose(trend, trend_ref, atol=1e-5, rtol=1e-5)
    assert jnp.allclose(seasonal, seasonal_ref, atol=1e-5, rtol=1e-5)

    # --- case 2: odd sizes (rows not a multiple of 8, L not a multiple of 128) ---
    B2, L2, C2 = 2, 20, 7
    x2 = jax.random.normal(kx2, (B2, L2, C2), dtype=jnp.float32)
    w2 = jax.random.uniform(kw2, (C2, 3), minval=-bound, maxval=bound, dtype=jnp.float32)
    b2 = jax.random.uniform(kb2, (C2,), minval=-bound, maxval=bound, dtype=jnp.float32)
    t2, s2 = robust_decomposition(x2, w2, b2)
    jax.block_until_ready((t2, s2))
    t2_ref, s2_ref = _reference(x2, w2, b2)
    assert jnp.allclose(t2, t2_ref, atol=1e-5, rtol=1e-5)
    assert jnp.allclose(s2, s2_ref, atol=1e-5, rtol=1e-5)

    # --- case 3: multi-block grid with a partial trailing row block ---
    B3, L3, C3 = 3, 40, 5
    x3 = jax.random.normal(kx3, (B3, L3, C3), dtype=jnp.float32)
    w3 = jax.random.uniform(kw2, (C3, 3), minval=-bound, maxval=bound, dtype=jnp.float32)
    b3 = jax.random.uniform(kb2, (C3,), minval=-bound, maxval=bound, dtype=jnp.float32)
    t3, s3 = robust_decomposition(x3, w3, b3, block_rows=8)
    jax.block_until_ready((t3, s3))
    t3_ref, s3_ref = _reference(x3, w3, b3)
    assert jnp.allclose(t3, t3_ref, atol=1e-5, rtol=1e-5)
    assert jnp.allclose(s3, s3_ref, atol=1e-5, rtol=1e-5)

    print("KERNEL_OK")
</pallas_src>

<mosaic_0001>
module attributes {stable_mosaic.version = 11 : i64} {
  func.func @kernel(%arg0: i32, %arg1: memref<8x8xf32, #tpu.memory_space<vmem>>, %arg2: memref<8x4xf32, #tpu.memory_space<vmem>>, %arg3: memref<8x8xf32, #tpu.memory_space<vmem>>, %arg4: memref<8x8xf32, #tpu.memory_space<vmem>>) attributes {dimension_semantics = [#tpu.dimension_semantics<parallel>], iteration_bounds = array<i64: 1>, scalar_prefetch = 0 : i64, scratch_operands = 0 : i64, tpu.core_type = #tpu.core_type<tc>, window_params = [{transform_indices = @transform_0, window_bounds = array<i64: 8, 8>}, {transform_indices = @transform_1, window_bounds = array<i64: 8, 4>}, {transform_indices = @transform_2, window_bounds = array<i64: 8, 8>}, {transform_indices = @transform_3, window_bounds = array<i64: 8, 8>}]} {
    %c0 = arith.constant 0 : index
    %c0_0 = arith.constant 0 : index
    %0 = vector.load %arg1[%c0, %c0_0] : memref<8x8xf32, #tpu.memory_space<vmem>>, vector<8x8xf32>
    %c0_1 = arith.constant 0 : index
    %c0_2 = arith.constant 0 : index
    %1 = vector.load %arg2[%c0_1, %c0_2] : memref<8x4xf32, #tpu.memory_space<vmem>>, vector<8x4xf32>
    %2 = tpu.iota {dimensions = array<i32: 1>} : vector<1x8xi32>
    %c0_i32 = arith.constant 0 : i32
    %3 = vector.broadcast %c0_i32 : i32 to vector<1x8xi32>
    %4 = arith.cmpi eq, %2, %3 : vector<1x8xi32>
    %c1_i32 = arith.constant 1 : i32
    %5 = tpu.dynamic_rotate %0 by %c1_i32 dim 1 : vector<8x8xf32>, i32 -> vector<8x8xf32>
    %cst = arith.constant 0.000000e+00 : f32
    %6 = vector.shape_cast %4 : vector<1x8xi1> to vector<1x8xi1>
    %7 = vector.broadcast %6 : vector<1x8xi1> to vector<8x8xi1>
    %8 = vector.broadcast %cst : f32 to vector<8x8xf32>
    %9 = arith.select %7, %8, %5 : vector<8x8xi1>, vector<8x8xf32>
    %c7_i32 = arith.constant 7 : i32
    %10 = vector.broadcast %c7_i32 : i32 to vector<1x8xi32>
    %11 = arith.cmpi eq, %2, %10 : vector<1x8xi32>
    %c7_i32_3 = arith.constant 7 : i32
    %12 = tpu.dynamic_rotate %0 by %c7_i32_3 dim 1 : vector<8x8xf32>, i32 -> vector<8x8xf32>
    %cst_4 = arith.constant 0.000000e+00 : f32
    %13 = vector.shape_cast %11 : vector<1x8xi1> to vector<1x8xi1>
    %14 = vector.broadcast %13 : vector<1x8xi1> to vector<8x8xi1>
    %15 = vector.broadcast %cst_4 : f32 to vector<8x8xf32>
    %16 = arith.select %14, %15, %12 : vector<8x8xi1>, vector<8x8xf32>
    %17 = vector.extract_strided_slice %1 {offsets = [0, 0], sizes = [8, 1], strides = [1, 1]} : vector<8x4xf32> to vector<8x1xf32>
    %18 = vector.broadcast %17 : vector<8x1xf32> to vector<8x8xf32>
    %19 = arith.mulf %18, %9 : vector<8x8xf32>
    %20 = vector.extract_strided_slice %1 {offsets = [0, 1], sizes = [8, 1], strides = [1, 1]} : vector<8x4xf32> to vector<8x1xf32>
    %21 = vector.broadcast %20 : vector<8x1xf32> to vector<8x8xf32>
    %22 = arith.mulf %21, %0 : vector<8x8xf32>
    %23 = arith.addf %19, %22 : vector<8x8xf32>
    %24 = vector.extract_strided_slice %1 {offsets = [0, 2], sizes = [8, 1], strides = [1, 1]} : vector<8x4xf32> to vector<8x1xf32>
    %25 = vector.broadcast %24 : vector<8x1xf32> to vector<8x8xf32>
    %26 = arith.mulf %25, %16 : vector<8x8xf32>
    %27 = arith.addf %23, %26 : vector<8x8xf32>
    %28 = vector.extract_strided_slice %1 {offsets = [0, 3], sizes = [8, 1], strides = [1, 1]} : vector<8x4xf32> to vector<8x1xf32>
    %29 = vector.broadcast %28 : vector<8x1xf32> to vector<8x8xf32>
    %30 = arith.addf %27, %29 : vector<8x8xf32>
    %c0_5 = arith.constant 0 : index
    %c0_6 = arith.constant 0 : index
    %31 = vector.load %arg3[%c0_5, %c0_6] : memref<8x8xf32, #tpu.memory_space<vmem>>, vector<8x8xf32>
    tpu.vector_store %arg3[%c0_5, %c0_6], %30 {strides = array<i32>} : memref<8x8xf32, #tpu.memory_space<vmem>>, vector<8x8xf32>,
    %32 = arith.subf %0, %30 : vector<8x8xf32>
    %c0_7 = arith.constant 0 : index
    %c0_8 = arith.constant 0 : index
    %33 = vector.load %arg4[%c0_7, %c0_8] : memref<8x8xf32, #tpu.memory_space<vmem>>, vector<8x8xf32>
    tpu.vector_store %arg4[%c0_7, %c0_8], %32 {strides = array<i32>} : memref<8x8xf32, #tpu.memory_space<vmem>>, vector<8x8xf32>,
    return
  }
  func.func @transform_0(%arg0: i32) -> (i32, i32) {
    %c0_i32 = arith.constant 0 : i32
    %c0_i32_0 = arith.constant 0 : i32
    return %arg0, %c0_i32 : i32, i32
  }
  func.func @transform_1(%arg0: i32) -> (i32, i32) {
    %c0_i32 = arith.constant 0 : i32
    %c0_i32_0 = arith.constant 0 : i32
    return %arg0, %c0_i32 : i32, i32
  }
  func.func @transform_2(%arg0: i32) -> (i32, i32) {
    %c0_i32 = arith.constant 0 : i32
    %c0_i32_0 = arith.constant 0 : i32
    return %arg0, %c0_i32 : i32, i32
  }
  func.func @transform_3(%arg0: i32) -> (i32, i32) {
    %c0_i32 = arith.constant 0 : i32
    %c0_i32_0 = arith.constant 0 : i32
    return %arg0, %c0_i32 : i32, i32
  }
}

</mosaic_0001>

<llo_original>
// kernel: tpu_custom_call.1
$region0: #{tpu_custom_call.1}
  #allocation0 [shape = 'u32[]', space=smem, size = 0x4, offset = 0x4, fixed_abs, tag = 'smem constant byte address 0x4 - core index']
  #allocation1 [shape = 'u32[144,128]{1,0:T(1,128)}', space=vmem, size = 0x12000, scoped, tag = 'internal scratch']
  %s0 = inlined_call_operand.vmem [shape: f32[8,8], index: 0, kind: input, shape index: {}]
  %s1 = inlined_call_operand.vmem [shape: f32[8,4], index: 1, kind: input, shape index: {}]
  %s2 = inlined_call_operand.hbm [shape: f32[8,8], index: 2, kind: output, shape index: {0}]
  %s3 = inlined_call_operand.hbm [shape: f32[8,8], index: 3, kind: output, shape index: {1}]
  %4 = xla_tuple %s2, %s3
  %s5 = sld [smem:[#allocation0]]
  $region26: #{tpu_custom_call.1} parent=0
    _
  %s7 = ssub.s32 1, %s5
  %s8 = scalar_select 0, %s7, %s5
  $region1: #{tpu_custom_call.1} parent=0
    #allocation2 [shape = 'u8[4096]{0}', space=vmem, size = 0x1000, scoped, tag = 'output window, operand 0, single buffered']
    #allocation3 [shape = 's32[1]{0}', space=sflag, size = 0x4, scoped, tag = 'scoped memory for tpu_custom_call.1']
    #allocation4 [shape = 'u8[4096]{0}', space=vmem, size = 0x1000, scoped, tag = 'output window, operand 1, single buffered']
    #allocation5 [shape = 's32[1]{0}', space=sflag, size = 0x4, scoped, tag = 'scoped memory for tpu_custom_call.1']
    %9 = vsyncpa [#allocation3], 0
    %10 = vsyncpa [#allocation5], 0
    // Predicated region
    $region2: #{tpu_custom_call.1} parent=1 // pred_check
      _
    $region3: #{tpu_custom_call.1} parent=1 // pred_check_branch
      %12 = sbr.rel (0) target = $region5
    $region4: #{tpu_custom_call.1} parent=1 // pred_region
      _
    $region5: #{tpu_custom_call.1} parent=1 // pred_fallthru
      _
    // Predicated region
    $region6: #{tpu_custom_call.1} parent=1 // pred_check
      _
    $region7: #{tpu_custom_call.1} parent=1 // pred_check_branch
      %14 = sbr.rel (0) target = $region9
    $region8: #{tpu_custom_call.1} parent=1 // pred_region
      _
    $region9: #{tpu_custom_call.1} parent=1 // pred_fallthru
      _
    %v15 = vld [vmem:[%s0] sm:$0xff]
    %v16 = vld [vmem:[%s1] sm:$0xff]
    %v17 = vlaneseq
    %v18 = vand.u32 %v17, 127
    %vm19 = vcmp.eq.s32.totalorder %v18, 0
    %vm20 = vcmask 1047616
    %21 = vrot.lane.b32.xlu0 %v15, 8
    %v22 = vpop.permute.xlu0 %21
    %v23 = vsel %vm20, %v22, %v15
    %24 = vrot.lane.b32.xlu0 %v23, 8
    %v25 = vpop.permute.xlu0 %24
    %v26 = vsel %vm20, %v25, %v15
    %v27 = vsel %vm19, 1, 0
    %vm28 = vcmp.eq.s32.totalorder %v27, 1
    %30 = vrot.lane.b32.xlu0 %v26, 121
    %v31 = vpop.permute.xlu0 %30
    %v33 = vsel %vm28, 0.0, %v31
    %vm34 = vcmp.eq.s32.totalorder %v18, 7
    %v35 = vsel %vm34, 1, 0
    %vm36 = vcmp.eq.s32.totalorder %v35, 1
    %37 = vrot.lane.b32.xlu0 %v26, 127
    %v38 = vpop.permute.xlu0 %37
    %v40 = vsel %vm36, 0.0, %v38
    %42 = vset.pattern.permute.xlu0 0
    %43 = vperm.xlu0 %42, %v16
    %v44 = vpop.permute.xlu0 %43
    %v46 = vmul.f32 %v44, %v33
    %47 = vset.pattern.permute.xlu0 1
    %48 = vperm.xlu0 %47, %v16
    %v49 = vpop.permute.xlu0 %48
    %v51 = vmul.f32 %v49, %v15
    %v52 = vadd.f32 %v46, %v51
    %53 = vset.pattern.permute.xlu0 2
    %54 = vperm.xlu0 %53, %v16
    %v55 = vpop.permute.xlu0 %54
    %v57 = vmul.f32 %v55, %v40
    %v58 = vadd.f32 %v52, %v57
    %59 = vset.pattern.permute.xlu0 3
    %60 = vperm.xlu0 %59, %v16
    %v61 = vpop.permute.xlu0 %60
    %v63 = vadd.f32 %v58, %v61
    %vm64 = vcmask 64512
    %65 = vst.msk [vmem:[#allocation2] sm:$0xff] %vm64, %v63
    %v66 = vsub.f32 %v15, %v63
    %67 = vst.msk [vmem:[#allocation4] sm:$0xff] %vm64, %v66
    // Predicated region
    $region10: #{tpu_custom_call.1} parent=1 // pred_check
      _
    $region11: #{tpu_custom_call.1} parent=1 // pred_check_branch
      %69 = sbr.rel (0) target = $region13
    $region12: #{tpu_custom_call.1} parent=1 // pred_region
      %s71 = ssub.s32 128, 128
      %72 = vsyncadd [#allocation3], %s71
      %s74 = sshll.u32 [#allocation2], 4
      %s75 = int_to_ptr.vmem [resolvable:$true] %s74
      %77 = dma.vmem_to_hbm [thread:$0]  %s75, 128, %s2, [#allocation3]
    $region13: #{tpu_custom_call.1} parent=1 // pred_fallthru
      _
    // Predicated region
    $region14: #{tpu_custom_call.1} parent=1 // pred_check
      _
    $region15: #{tpu_custom_call.1} parent=1 // pred_check_branch
      %79 = sbr.rel (0) target = $region17
    $region16: #{tpu_custom_call.1} parent=1 // pred_region
      %s81 = ssub.s32 128, 128
      %82 = vsyncadd [#allocation5], %s81
      %s84 = sshll.u32 [#allocation4], 4
      %s85 = int_to_ptr.vmem [resolvable:$true] %s84
      %87 = dma.vmem_to_hbm [thread:$0]  %s85, 128, %s3, [#allocation5]
    $region17: #{tpu_custom_call.1} parent=1 // pred_fallthru
      _
    // Predicated region
    $region18: #{tpu_custom_call.1} parent=1 // pred_check
      _
    $region19: #{tpu_custom_call.1} parent=1 // pred_check_branch
      %89 = sbr.rel (0) target = $region21
    $region20: #{tpu_custom_call.1} parent=1 // pred_region
      %90 = dma.done [#allocation3], 128
    $region21: #{tpu_custom_call.1} parent=1 // pred_fallthru
      _
    // Predicated region
    $region22: #{tpu_custom_call.1} parent=1 // pred_check
      _
    $region23: #{tpu_custom_call.1} parent=1 // pred_check_branch
      %92 = sbr.rel (0) target = $region25
    $region24: #{tpu_custom_call.1} parent=1 // pred_region
      %93 = dma.done [#allocation5], 128
    $region25: #{tpu_custom_call.1} parent=1 // pred_fallthru
      _
    %94 = vsyncpa [#allocation3], 1
    %95 = vsyncpa [#allocation5], 1

</llo_original>
